<compile_context>
chip_gen: v7x
topology: tpu7x:2x2x1
jax: 0.10.0
libtpu: 0.0.40
codegen_flags: <defaults>
</compile_context>

<pallas_src>
import jax
import jax.numpy as jnp
from jax.experimental import pallas as pl
from jax.experimental.pallas import tpu as pltpu


def _attn_kernel(x_ref, wvk_ref, bvk_ref, wq_ref, bq_ref, o_ref):
    # x_ref   : (1, C, HW)         channels on sublanes, HW on lanes
    # wvk_ref : (C + 1 + C8, C)    rows = [ (1+gamma)*256 * Wv ; zeros ; Wk ]
    # bvk_ref : (C + 1 + C8, 1)    rows = [ (1+gamma)*256 * bv ; 1     ; bk ] (f32)
    # wq_ref  : (C8, C), bq_ref : (C8, 1)
    # o_ref   : (1, C, TQ)
    C = x_ref.shape[1]
    TQ = o_ref.shape[2]
    qi = pl.program_id(1)

    x = x_ref[0]                                                       # (C, HW)

    # Fused [value ; ones ; key] projection over the full spatial extent.
    vk = jnp.dot(wvk_ref[...], x,
                 preferred_element_type=jnp.float32) + bvk_ref[...]    # (C+1+C8, HW)
    v_aug = vk[:C + 1, :]      # (C+1, HW): scaled value rows + all-ones row
    k = vk[C + 1:, :]          # (C8, HW)

    # Query projection only for this query tile (lane-aligned ref slice).
    q_start = pl.multiple_of(qi * TQ, TQ)
    x_q = x_ref[0, :, pl.ds(q_start, TQ)]                              # (C, TQ)
    q = jnp.dot(wq_ref[...], x_q,
                preferred_element_type=jnp.float32) + bq_ref[...]      # (C8, TQ)

    # energy[i, j] = <q[:, i], k[:, j]>  -> (TQ, HW), keys on lanes.
    energy = jax.lax.dot_general(q, k, (((0,), (0,)), ((), ())),
                                 preferred_element_type=jnp.float32)
    m = jnp.max(energy, axis=-1, keepdims=True)
    p = jnp.exp(energy - m)                    # unnormalized softmax weights

    # out_aug[c, i] = sum_j v_aug[c, j] * p[i, j]; last row = softmax row-sums.
    out_aug = jax.lax.dot_general(v_aug, p, (((1,), (1,)), ((), ())),
                                  preferred_element_type=jnp.float32)  # (C+1, TQ)
    inv = pl.reciprocal(out_aug[C:C + 1, :], approx=True)              # (1, TQ), EUP

    # (1+gamma)*attn_out then floor(x*256)/256; the *(1+gamma)*256 is already
    # folded into the value rows, so only the divide and the floor remain.
    o_ref[0] = (jnp.floor(out_aug[:C, :] * inv) * (1.0 / 256.0)).astype(o_ref.dtype)


def simplified_self_attention(x_nchw, params, *, tq=None, compute_dtype=None):
    B, C, H, W = x_nchw.shape
    HW = H * W
    C8 = params["wq"].shape[0]

    if tq is None:
        tq = HW if HW <= 512 else 512
    assert HW % tq == 0, "query tile must divide H*W"
    assert tq == HW or tq % 128 == 0, "query tile should be lane-aligned"

    cdt = compute_dtype if compute_dtype is not None else x_nchw.dtype

    # Fold the residual scale (1+gamma) and the quantizer prescale 2^8 into the
    # value projection; the ones-row (zero weights, bias 1) yields the softmax
    # row-sums from the same attn @ V matmul inside the kernel.
    gamma = params["gamma"].reshape(()).astype(jnp.float32)
    vscale = (1.0 + gamma) * 256.0
    wv = params["wv"].astype(jnp.float32) * vscale
    bv = params["bv"].astype(jnp.float32) * vscale
    wvk = jnp.concatenate(
        [wv, jnp.zeros((1, C), jnp.float32), params["wk"].astype(jnp.float32)], axis=0)
    bvk = jnp.concatenate(
        [bv, jnp.ones((1,), jnp.float32), params["bk"].astype(jnp.float32)],
        axis=0).reshape(-1, 1)
    wq = params["wq"].astype(jnp.float32)
    bq = params["bq"].astype(jnp.float32).reshape(C8, 1)

    # NCHW -> (B, C, HW): pure reshape, no transpose; HW lands on the lane axis.
    x = x_nchw.reshape(B, C, HW).astype(cdt)
    wvk = wvk.astype(cdt)
    wq = wq.astype(cdt)
    R = wvk.shape[0]

    out = pl.pallas_call(
        _attn_kernel,
        out_shape=jax.ShapeDtypeStruct((B, C, HW), x_nchw.dtype),
        grid_spec=pltpu.PrefetchScalarGridSpec(
            num_scalar_prefetch=0,
            grid=(B, HW // tq),
            in_specs=[
                pl.BlockSpec((1, C, HW), lambda b, qi: (b, 0, 0)),   # x (full spatial)
                pl.BlockSpec((R, C), lambda b, qi: (0, 0)),          # [v;ones;k] weights
                pl.BlockSpec((R, 1), lambda b, qi: (0, 0)),          # fused bias (f32)
                pl.BlockSpec((C8, C), lambda b, qi: (0, 0)),         # Wq
                pl.BlockSpec((C8, 1), lambda b, qi: (0, 0)),         # bq (f32)
            ],
            out_specs=pl.BlockSpec((1, C, tq), lambda b, qi: (b, 0, qi)),
        ),
        compiler_params=pltpu.CompilerParams(
            dimension_semantics=("parallel", "parallel"),
            vmem_limit_bytes=48 * 1024 * 1024),
    )(x, wvk, bvk, wq, bq)

    # (B, C, HW) -> NCHW: pure reshape, no transpose.
    return out.reshape(B, C, H, W)


def _reference(x_nchw, params):
    """Pure-JAX reference mirroring the PyTorch forward (for sanity check)."""
    B, C, H, W = x_nchw.shape
    HW = H * W
    x = x_nchw.reshape(B, C, HW)
    q = jnp.einsum("oc,bcs->bos", params["wq"], x) + params["bq"][None, :, None]
    k = jnp.einsum("oc,bcs->bos", params["wk"], x) + params["bk"][None, :, None]
    v = jnp.einsum("oc,bcs->bos", params["wv"], x) + params["bv"][None, :, None]
    energy = jnp.einsum("bci,bcj->bij", q, k)
    attn = jax.nn.softmax(energy, axis=-1)
    out = jnp.einsum("bcj,bij->bci", v, attn)
    out = out.reshape(B, C, H, W)
    out = params["gamma"][0] * out + out          # gamma*x + x (no input residual)
    return jnp.floor(out * 256.0) / 256.0         # FeatureSqueezingLayer(bit_depth=8)


def make_params(key, in_channels):
    c8 = in_channels // 8
    ks = jax.random.split(key, 6)
    scale = 0.1
    return {
        "wq": scale * jax.random.normal(ks[0], (c8, in_channels), jnp.float32),
        "bq": scale * jax.random.normal(ks[1], (c8,), jnp.float32),
        "wk": scale * jax.random.normal(ks[2], (c8, in_channels), jnp.float32),
        "bk": scale * jax.random.normal(ks[3], (c8,), jnp.float32),
        "wv": scale * jax.random.normal(ks[4], (in_channels, in_channels), jnp.float32),
        "bv": scale * jax.random.normal(ks[5], (in_channels,), jnp.float32),
        "gamma": jnp.zeros((1,), jnp.float32),   # nn.Parameter(torch.zeros(1))
    }


if __name__ == "__main__":
    B, C, H, W = 2, 16, 16, 16     # in_channels must be >= 8 (C // 8 conv width)
    key = jax.random.PRNGKey(0)
    kx, kp = jax.random.split(key)
    x = jax.random.normal(kx, (B, C, H, W), jnp.float32)
    params = make_params(kp, C)
    # Non-zero gamma exercises the folded residual scale.
    params["gamma"] = jnp.array([0.25], jnp.float32)

    # f32 path; tq=128 exercises the query-tile grid axis (grid = (2, 2)).
    out = jax.block_until_ready(simplified_self_attention(x, params, tq=128))
    ref = jax.block_until_ready(_reference(x, params))
    assert out.shape == (B, C, H, W)
    assert bool(jnp.all(jnp.isfinite(out)))
    # Loose tolerance: floor() at bin boundaries can differ by one 1/256 step.
    assert float(jnp.max(jnp.abs(out - ref))) <= 1e-2

    # bf16 MXU-input path (f32 accumulate, f32 softmax/quantizer); looser
    # tolerance for bf16 rounding feeding the 1/256 floor quantizer.
    out_bf16 = jax.block_until_ready(
        simplified_self_attention(x, params, tq=128, compute_dtype=jnp.bfloat16))
    assert bool(jnp.all(jnp.isfinite(out_bf16)))
    assert float(jnp.max(jnp.abs(out_bf16 - ref))) <= 3e-2

    print("KERNEL_OK")
</pallas_src>

<mosaic_0001>
module attributes {stable_mosaic.version = 11 : i64} {
  func.func @_attn_kernel(%arg0: i32, %arg1: i32, %arg2: memref<1x16x256xf32, #tpu.memory_space<vmem>>, %arg3: memref<19x16xf32, #tpu.memory_space<vmem>>, %arg4: memref<19x1xf32, #tpu.memory_space<vmem>>, %arg5: memref<2x16xf32, #tpu.memory_space<vmem>>, %arg6: memref<2x1xf32, #tpu.memory_space<vmem>>, %arg7: memref<1x16x128xf32, #tpu.memory_space<vmem>>) attributes {dimension_semantics = [#tpu.dimension_semantics<parallel>, #tpu.dimension_semantics<parallel>], iteration_bounds = array<i64: 2, 2>, scalar_prefetch = 0 : i64, scratch_operands = 0 : i64, tpu.core_type = #tpu.core_type<tc>, window_params = [{transform_indices = @transform_0, window_bounds = array<i64: 1, 16, 256>}, {pipeline_mode = #tpu.pipeline_mode<synchronous>, transform_indices = @transform_1, window_bounds = array<i64: 19, 16>}, {pipeline_mode = #tpu.pipeline_mode<synchronous>, transform_indices = @transform_2, window_bounds = array<i64: 19, 1>}, {pipeline_mode = #tpu.pipeline_mode<synchronous>, transform_indices = @transform_3, window_bounds = array<i64: 2, 16>}, {pipeline_mode = #tpu.pipeline_mode<synchronous>, transform_indices = @transform_4, window_bounds = array<i64: 2, 1>}, {transform_indices = @transform_5, window_bounds = array<i64: 1, 16, 128>}]} {
    %c0 = arith.constant 0 : index
    %c0_0 = arith.constant 0 : index
    %c0_1 = arith.constant 0 : index
    %0 = vector.load %arg2[%c0, %c0_0, %c0_1] : memref<1x16x256xf32, #tpu.memory_space<vmem>>, vector<1x16x256xf32>
    %1 = vector.shape_cast %0 : vector<1x16x256xf32> to vector<16x256xf32>
    %c0_2 = arith.constant 0 : index
    %c0_3 = arith.constant 0 : index
    %2 = vector.load %arg3[%c0_2, %c0_3] : memref<19x16xf32, #tpu.memory_space<vmem>>, vector<19x16xf32>
    %cst = arith.constant dense<0.000000e+00> : vector<19x256xf32>
    %3 = tpu.matmul %2, %1, %cst {dimension_numbers = #tpu.dot_dimension_numbers<[1], [0], [0], [1], [0, 0, 1, 1], [], []>} : vector<19x16xf32>, vector<16x256xf32>, vector<19x256xf32> -> vector<19x256xf32>
    %c0_4 = arith.constant 0 : index
    %c0_5 = arith.constant 0 : index
    %4 = vector.load %arg4[%c0_4, %c0_5] : memref<19x1xf32, #tpu.memory_space<vmem>>, vector<19x1xf32>
    %5 = vector.broadcast %4 : vector<19x1xf32> to vector<19x256xf32>
    %6 = arith.addf %3, %5 : vector<19x256xf32>
    %7 = vector.extract_strided_slice %6 {offsets = [0, 0], sizes = [17, 256], strides = [1, 1]} : vector<19x256xf32> to vector<17x256xf32>
    %8 = vector.extract_strided_slice %6 {offsets = [17, 0], sizes = [2, 256], strides = [1, 1]} : vector<19x256xf32> to vector<2x256xf32>
    %c128_i32 = arith.constant 128 : i32
    %9 = arith.muli %arg1, %c128_i32 : i32
    %10 = tpu.assume_multiple %9, 128 : i32
    %c0_6 = arith.constant 0 : index
    %c0_7 = arith.constant 0 : index
    %11 = arith.index_cast %10 : i32 to index
    %12 = vector.load %arg2[%c0_6, %c0_7, %11] : memref<1x16x256xf32, #tpu.memory_space<vmem>>, vector<1x16x128xf32>
    %13 = vector.shape_cast %12 : vector<1x16x128xf32> to vector<16x128xf32>
    %c0_8 = arith.constant 0 : index
    %c0_9 = arith.constant 0 : index
    %14 = vector.load %arg5[%c0_8, %c0_9] : memref<2x16xf32, #tpu.memory_space<vmem>>, vector<2x16xf32>
    %cst_10 = arith.constant dense<0.000000e+00> : vector<2x128xf32>
    %15 = tpu.matmul %14, %13, %cst_10 {dimension_numbers = #tpu.dot_dimension_numbers<[1], [0], [0], [1], [0, 0, 1, 1], [], []>} : vector<2x16xf32>, vector<16x128xf32>, vector<2x128xf32> -> vector<2x128xf32>
    %c0_11 = arith.constant 0 : index
    %c0_12 = arith.constant 0 : index
    %16 = vector.load %arg6[%c0_11, %c0_12] : memref<2x1xf32, #tpu.memory_space<vmem>>, vector<2x1xf32>
    %17 = vector.broadcast %16 : vector<2x1xf32> to vector<2x128xf32>
    %18 = arith.addf %15, %17 : vector<2x128xf32>
    %cst_13 = arith.constant dense<0.000000e+00> : vector<128x256xf32>
    %19 = tpu.matmul %18, %8, %cst_13 {dimension_numbers = #tpu.dot_dimension_numbers<[0], [0], [1], [1], [0, 1, 1, 1], [], []>} : vector<2x128xf32>, vector<2x256xf32>, vector<128x256xf32> -> vector<128x256xf32>
    %cst_14 = arith.constant dense<0xFF800000> : vector<128xf32>
    %20 = vector.multi_reduction <maximumf>, %19, %cst_14 [1] : vector<128x256xf32> to vector<128xf32>
    %21 = vector.shape_cast %20 : vector<128xf32> to vector<128x1xf32>
    %22 = vector.broadcast %21 : vector<128x1xf32> to vector<128x256xf32>
    %23 = arith.subf %19, %22 : vector<128x256xf32>
    %24 = math.exp %23 : vector<128x256xf32>
    %cst_15 = arith.constant dense<0.000000e+00> : vector<17x128xf32>
    %25 = tpu.matmul %7, %24, %cst_15 {dimension_numbers = #tpu.dot_dimension_numbers<[1], [1], [0], [0], [0, 0, 1, 0], [], []>} : vector<17x256xf32>, vector<128x256xf32>, vector<17x128xf32> -> vector<17x128xf32>
    %26 = vector.extract_strided_slice %25 {offsets = [16, 0], sizes = [1, 128], strides = [1, 1]} : vector<17x128xf32> to vector<1x128xf32>
    %27 = tpu.reciprocal %26 {approx = true} : vector<1x128xf32> -> vector<1x128xf32>
    %28 = vector.extract_strided_slice %25 {offsets = [0, 0], sizes = [16, 128], strides = [1, 1]} : vector<17x128xf32> to vector<16x128xf32>
    %29 = vector.broadcast %27 : vector<1x128xf32> to vector<16x128xf32>
    %30 = arith.mulf %28, %29 : vector<16x128xf32>
    %31 = math.floor %30 : vector<16x128xf32>
    %cst_16 = arith.constant 3.906250e-03 : f32
    %32 = vector.broadcast %cst_16 : f32 to vector<16x128xf32>
    %33 = arith.mulf %31, %32 : vector<16x128xf32>
    %c0_17 = arith.constant 0 : index
    %c0_18 = arith.constant 0 : index
    %c0_19 = arith.constant 0 : index
    %34 = vector.load %arg7[%c0_17, %c0_18, %c0_19] : memref<1x16x128xf32, #tpu.memory_space<vmem>>, vector<1x16x128xf32>
    %35 = vector.shape_cast %34 : vector<1x16x128xf32> to vector<16x128xf32>
    %36 = vector.shape_cast %33 : vector<16x128xf32> to vector<1x16x128xf32>
    tpu.vector_store %arg7[%c0_17, %c0_18, %c0_19], %36 {strides = array<i32>} : memref<1x16x128xf32, #tpu.memory_space<vmem>>, vector<1x16x128xf32>,
    return
  }
  func.func @transform_0(%arg0: i32, %arg1: i32) -> (i32, i32, i32) {
    %c0_i32 = arith.constant 0 : i32
    %c0_i32_0 = arith.constant 0 : i32
    %c0_i32_1 = arith.constant 0 : i32
    return %arg0, %c0_i32, %c0_i32_0 : i32, i32, i32
  }
  func.func @transform_1(%arg0: i32, %arg1: i32) -> (i32, i32) {
    %c0_i32 = arith.constant 0 : i32
    %c0_i32_0 = arith.constant 0 : i32
    %c0_i32_1 = arith.constant 0 : i32
    return %c0_i32, %c0_i32_0 : i32, i32
  }
  func.func @transform_2(%arg0: i32, %arg1: i32) -> (i32, i32) {
    %c0_i32 = arith.constant 0 : i32
    %c0_i32_0 = arith.constant 0 : i32
    %c0_i32_1 = arith.constant 0 : i32
    return %c0_i32, %c0_i32_0 : i32, i32
  }
  func.func @transform_3(%arg0: i32, %arg1: i32) -> (i32, i32) {
    %c0_i32 = arith.constant 0 : i32
    %c0_i32_0 = arith.constant 0 : i32
    %c0_i32_1 = arith.constant 0 : i32
    return %c0_i32, %c0_i32_0 : i32, i32
  }
  func.func @transform_4(%arg0: i32, %arg1: i32) -> (i32, i32) {
    %c0_i32 = arith.constant 0 : i32
    %c0_i32_0 = arith.constant 0 : i32
    %c0_i32_1 = arith.constant 0 : i32
    return %c0_i32, %c0_i32_0 : i32, i32
  }
  func.func @transform_5(%arg0: i32, %arg1: i32) -> (i32, i32, i32) {
    %c0_i32 = arith.constant 0 : i32
    %c0_i32_0 = arith.constant 0 : i32
    return %arg0, %c0_i32, %arg1 : i32, i32, i32
  }
}

</mosaic_0001>

<llo_original>
// kernel: tpu_custom_call.1
$region0: #{tpu_custom_call.1}
  #allocation0 [shape = 'u32[]', space=smem, size = 0x4, offset = 0x4, fixed_abs, tag = 'smem constant byte address 0x4 - core index']
  #allocation1 [shape = 'u32[144,128]{1,0:T(1,128)}', space=vmem, size = 0x12000, scoped, tag = 'internal scratch']
  %s0 = inlined_call_operand.vmem [shape: f32[2,16,256], index: 0, kind: input, shape index: {}]
  %s1 = inlined_call_operand.vmem [shape: f32[19,16], index: 1, kind: input, shape index: {}]
  %s2 = inlined_call_operand.vmem [shape: f32[19,1], index: 2, kind: input, shape index: {}]
  %s3 = inlined_call_operand.vmem [shape: f32[2,16], index: 3, kind: input, shape index: {}]
  %s4 = inlined_call_operand.vmem [shape: f32[2,1], index: 4, kind: input, shape index: {}]
  %s5 = inlined_call_operand.hbm [shape: f32[2,16,256], index: 5, kind: output, shape index: {}]
  %s6 = sld [smem:[#allocation0]]
  $region53: #{tpu_custom_call.1} parent=0
    _
  %s8 = ssub.s32 1, %s6
  %s9 = scalar_select 0, %s8, %s6
  $region1: #{tpu_custom_call.1} parent=0
    #allocation2 [shape = 'u8[16384]{0}', space=vmem, size = 0x4000, scoped, tag = 'output window, operand 0']
    #allocation3 [shape = 's32[2]{0}', space=sflag, size = 0x8, scoped, tag = 'scoped memory for tpu_custom_call.1']
    %10 = vsyncpa [#allocation3], 0
    %s11 = scalar_lea.sflag [#allocation3], 1
    %12 = vsyncpa %s11, 0
    loop: start=0, step=1, limit=6
    $region2: #{tpu_custom_call.1} parent=1 // loop_pre_header
      _
    $region3: #{tpu_custom_call.1} parent=1 // loop_header
      %s14 = sphi 0, %s18
      %p15 = scmp.ge.s32.totalorder %s14, 6
      %s21 = sphi 0, %s33
      %s22 = sphi 0, %s29
      %s23 = sphi 0, %s21
      %s24 = sphi 0, %s22
      %s25 = sphi 0, %s23
      %s26 = sphi 0, %s24
      %s36 = sphi 0, %s38
      %s39 = sphi 0, %s36
      %s40 = sphi 0, %s39
      %s56 = sphi 0, %s40
      %s60 = sphi 0, %s60
      %s62 = sphi 0, %s60
      %s63 = sphi 0, %s62
      %s77 = sphi 0, %s63
      %s81 = sphi 0, %s81
      %s83 = sphi 0, %s81
      %s84 = sphi 0, %s83
      %s98 = sphi 0, %s84
      %s102 = sphi 0, %s102
      %s104 = sphi 0, %s102
      %s105 = sphi 0, %s104
      %s119 = sphi 0, %s105
      %s123 = sphi 0, %s123
      %s125 = sphi 0, %s123
      %s126 = sphi 0, %s125
      %s140 = sphi 0, %s126
      %s148 = sphi 0, %s150
      %s151 = sphi 0, %s148
      %s152 = sphi 0, %s151
      %s168 = sphi 0, %s152
    $region4: #{tpu_custom_call.1} parent=1 // loop_header_branch
      %17 = sbr.rel (%p15) target = $region8
    $region5: #{tpu_custom_call.1} parent=1 // loop_body
      %s19 = ssub.s32 %s14, 1
      %s20 = ssub.s32 %s14, 2
      %s27 = sadd.s32 1, %s22
      %p28 = scmp.ge.s32.totalorder %s27, 2
      %s29 = scalar_select %p28, 0, %s27
      %s30 = sadd.s32 1, %s21
      %s31 = scalar_select %p28, %s30, %s21
      %p32 = scmp.ge.s32.totalorder %s31, 2
      %s33 = scalar_select %p32, 0, %s31
      %s34 = ssub.s32 %s21, %s33
      %p35 = scmp.eq.s32.totalorder %s34, 0
      %s37 = sadd.s32 %s36, 1
      %s38 = scalar_select %p35, %s36, %s37
      %p41 = pneg %p35
      %p42 = scmp.eq.s32.totalorder %s14, 3
      %p43 = por %p41, %p42
      %p44 = scmp.ne.s32.totalorder %s36, %s39
      %p45 = scmp.eq.s32.totalorder %s14, 0
      %p46 = por %p44, %p45
      %p47 = scmp.ne.s32.totalorder %s36, %s39
      %p48 = scmp.eq.s32.totalorder %s19, 3
      %p49 = por %p47, %p48
      %p50 = scmp.ne.s32.totalorder %s39, %s40
      %p51 = scmp.eq.s32.totalorder %s19, 0
      %p52 = por %p50, %p51
      %p53 = scmp.ne.s32.totalorder %s39, %s40
      %p54 = scmp.eq.s32.totalorder %s20, 3
      %p55 = por %p53, %p54
      %p57 = scmp.ne.s32.totalorder %s40, %s56
      %p58 = scmp.eq.s32.totalorder %s20, 0
      %p59 = por %p57, %p58
      %s61 = sadd.s32 %s60, 1
      %p64 = scmp.eq.s32.totalorder %s14, 3
      %p65 = scmp.ne.s32.totalorder %s60, %s62
      %p66 = scmp.eq.s32.totalorder %s14, 0
      %p67 = por %p65, %p66
      %p68 = scmp.ne.s32.totalorder %s60, %s62
      %p69 = scmp.eq.s32.totalorder %s19, 3
      %p70 = por %p68, %p69
      %p71 = scmp.ne.s32.totalorder %s62, %s63
      %p72 = scmp.eq.s32.totalorder %s19, 0
      %p73 = por %p71, %p72
      %p74 = scmp.ne.s32.totalorder %s62, %s63
      %p75 = scmp.eq.s32.totalorder %s20, 3
      %p76 = por %p74, %p75
      %p78 = scmp.ne.s32.totalorder %s63, %s77
      %p79 = scmp.eq.s32.totalorder %s20, 0
      %p80 = por %p78, %p79
      %s82 = sadd.s32 %s81, 1
      %p85 = scmp.eq.s32.totalorder %s14, 3
      %p86 = scmp.ne.s32.totalorder %s81, %s83
      %p87 = scmp.eq.s32.totalorder %s14, 0
      %p88 = por %p86, %p87
      %p89 = scmp.ne.s32.totalorder %s81, %s83
      %p90 = scmp.eq.s32.totalorder %s19, 3
      %p91 = por %p89, %p90
      %p92 = scmp.ne.s32.totalorder %s83, %s84
      %p93 = scmp.eq.s32.totalorder %s19, 0
      %p94 = por %p92, %p93
      %p95 = scmp.ne.s32.totalorder %s83, %s84
      %p96 = scmp.eq.s32.totalorder %s20, 3
      %p97 = por %p95, %p96
      %p99 = scmp.ne.s32.totalorder %s84, %s98
      %p100 = scmp.eq.s32.totalorder %s20, 0
      %p101 = por %p99, %p100
      %s103 = sadd.s32 %s102, 1
      %p106 = scmp.eq.s32.totalorder %s14, 3
      %p107 = scmp.ne.s32.totalorder %s102, %s104
      %p108 = scmp.eq.s32.totalorder %s14, 0
      %p109 = por %p107, %p108
      %p110 = scmp.ne.s32.totalorder %s102, %s104
      %p111 = scmp.eq.s32.totalorder %s19, 3
      %p112 = por %p110, %p111
      %p113 = scmp.ne.s32.totalorder %s104, %s105
      %p114 = scmp.eq.s32.totalorder %s19, 0
      %p115 = por %p113, %p114
      %p116 = scmp.ne.s32.totalorder %s104, %s105
      %p117 = scmp.eq.s32.totalorder %s20, 3
      %p118 = por %p116, %p117
      %p120 = scmp.ne.s32.totalorder %s105, %s119
      %p121 = scmp.eq.s32.totalorder %s20, 0
      %p122 = por %p120, %p121
      %s124 = sadd.s32 %s123, 1
      %p127 = scmp.eq.s32.totalorder %s14, 3
      %p128 = scmp.ne.s32.totalorder %s123, %s125
      %p129 = scmp.eq.s32.totalorder %s14, 0
      %p130 = por %p128, %p129
      %p131 = scmp.ne.s32.totalorder %s123, %s125
      %p132 = scmp.eq.s32.totalorder %s19, 3
      %p133 = por %p131, %p132
      %p134 = scmp.ne.s32.totalorder %s125, %s126
      %p135 = scmp.eq.s32.totalorder %s19, 0
      %p136 = por %p134, %p135
      %p137 = scmp.ne.s32.totalorder %s125, %s126
      %p138 = scmp.eq.s32.totalorder %s20, 3
      %p139 = por %p137, %p138
      %p141 = scmp.ne.s32.totalorder %s126, %s140
      %p142 = scmp.eq.s32.totalorder %s20, 0
      %p143 = por %p141, %p142
      %s144 = ssub.s32 %s21, %s33
      %s145 = ssub.s32 %s22, %s29
      %s146 = sor.u32 %s144, %s145
      %p147 = scmp.eq.s32.totalorder %s146, 0
      %s149 = sadd.s32 %s148, 1
      %s150 = scalar_select %p147, %s148, %s149
      %p153 = pneg %p147
      %p154 = scmp.eq.s32.totalorder %s14, 3
      %p155 = por %p153, %p154
      %p156 = scmp.ne.s32.totalorder %s148, %s151
      %p157 = scmp.eq.s32.totalorder %s14, 0
      %p158 = por %p156, %p157
      %p159 = scmp.ne.s32.totalorder %s148, %s151
      %p160 = scmp.eq.s32.totalorder %s19, 3
      %p161 = por %p159, %p160
      %p162 = scmp.ne.s32.totalorder %s151, %s152
      %p163 = scmp.eq.s32.totalorder %s19, 0
      %p164 = por %p162, %p163
      %p165 = scmp.ne.s32.totalorder %s151, %s152
      %p166 = scmp.eq.s32.totalorder %s20, 3
      %p167 = por %p165, %p166
      %p169 = scmp.ne.s32.totalorder %s152, %s168
      %p170 = scmp.eq.s32.totalorder %s20, 0
      %p171 = por %p169, %p170
      %p172 = scmp.le.s32.totalorder 1, %s14
      %p173 = scmp.lt.s32.totalorder %s14, 5
      %p174 = pnand %p172, %p173
      %p175 = pneg %p174
      // Predicated region
      $region9: #{tpu_custom_call.1} parent=5 // pred_check
        _
      $region10: #{tpu_custom_call.1} parent=5 // pred_check_branch
        %177 = sbr.rel (%p174) target = $region12
      $region11: #{tpu_custom_call.1} parent=5 // pred_region
        %s178 = ssub.s32 %s14, 1
        // Predicated region
        $region13: #{tpu_custom_call.1} parent=11 // pred_check
          %p179 = pneg %p73
        $region14: #{tpu_custom_call.1} parent=11 // pred_check_branch
          %181 = sbr.rel (%p179) target = $region16
        $region15: #{tpu_custom_call.1} parent=11 // pred_region
          _
        $region16: #{tpu_custom_call.1} parent=11 // pred_fallthru
          _
        // Predicated region
        $region17: #{tpu_custom_call.1} parent=11 // pred_check
          %p182 = pneg %p94
        $region18: #{tpu_custom_call.1} parent=11 // pred_check_branch
          %184 = sbr.rel (%p182) target = $region20
        $region19: #{tpu_custom_call.1} parent=11 // pred_region
          _
        $region20: #{tpu_custom_call.1} parent=11 // pred_fallthru
          _
        // Predicated region
        $region21: #{tpu_custom_call.1} parent=11 // pred_check
          %p185 = pneg %p115
        $region22: #{tpu_custom_call.1} parent=11 // pred_check_branch
          %187 = sbr.rel (%p185) target = $region24
        $region23: #{tpu_custom_call.1} parent=11 // pred_region
          _
        $region24: #{tpu_custom_call.1} parent=11 // pred_fallthru
          _
        // Predicated region
        $region25: #{tpu_custom_call.1} parent=11 // pred_check
          %p188 = pneg %p136
        $region26: #{tpu_custom_call.1} parent=11 // pred_check_branch
          %190 = sbr.rel (%p188) target = $region28
        $region27: #{tpu_custom_call.1} parent=11 // pred_region
          _
        $region28: #{tpu_custom_call.1} parent=11 // pred_fallthru
          _
      $region12: #{tpu_custom_call.1} parent=5 // pred_fallthru
        _
      %p191 = scmp.lt.s32.totalorder %s14, 4
      // Predicated region
      $region29: #{tpu_custom_call.1} parent=5 // pred_check
        %p192 = pneg %p191
      $region30: #{tpu_custom_call.1} parent=5 // pred_check_branch
        %194 = sbr.rel (%p192) target = $region32
      $region31: #{tpu_custom_call.1} parent=5 // pred_region
        // Predicated region
        $region33: #{tpu_custom_call.1} parent=31 // pred_check
          %p195 = pneg %p46
        $region34: #{tpu_custom_call.1} parent=31 // pred_check_branch
          %197 = sbr.rel (%p195) target = $region36
        $region35: #{tpu_custom_call.1} parent=31 // pred_region
          %p198 = scmp.lt.s32.totalorder %s21, 1
          %s199 = scalar_select %p198, %s21, 1
          %s200 = smul.addr %s199, 4
          %s201 = smul.addr %s200, 8
          %s202 = scalar_lea.vmem %s0, %s201
        $region36: #{tpu_custom_call.1} parent=31 // pred_fallthru
          _
      $region32: #{tpu_custom_call.1} parent=5 // pred_fallthru
        _
      %p203 = scmp.le.s32.totalorder 1, %s14
      %p204 = scmp.lt.s32.totalorder %s14, 5
      %p205 = pnand %p203, %p204
      %p206 = pneg %p205
      // Predicated region
      $region37: #{tpu_custom_call.1} parent=5 // pred_check
        _
      $region38: #{tpu_custom_call.1} parent=5 // pred_check_branch
        %208 = sbr.rel (%p205) target = $region40
      $region39: #{tpu_custom_call.1} parent=5 // pred_region
        %s209 = ssub.s32 %s14, 1
        %p210 = scmp.lt.s32.totalorder %s23, 1
        %s211 = scalar_select %p210, %s23, 1
        %s212 = smul.addr %s211, 4
        %s213 = smul.addr %s212, 8
        %s214 = scalar_lea.vmem %s0, %s213
        %p215 = pneg %p52
        %p216 = pneg %p49
        %p217 = pneg %p73
        %p218 = pneg %p70
        %p219 = pneg %p94
        %p220 = pneg %p91
        %p221 = pneg %p115
        %p222 = pneg %p112
        %p223 = pneg %p136
        %p224 = pneg %p133
        %p225 = pneg %p164
        %p226 = pneg %p161
        %s227 = sand.u32 %s151, 1
        %s228 = scalar_lea.sflag [#allocation3], %s227
        %s229 = sand.u32 %s151, 1
        %s230 = smul.addr %s229, 16
        %s231 = scalar_lea.vmem [#allocation2], %s230
        %p232 = scmp.lt.s32.totalorder %s23, 1
        %s233 = scalar_select %p232, %s23, 1
        %s234 = smul.addr %s233, 4
        %s235 = smul.addr %s234, 8
        %s236 = scalar_lea.vmem %s0, %s235
        %v237 = vld [vmem:[%s236] sm:$0xff]
        %v238 = vld [vmem:[%s236 + $0x8] sm:$0xff]
        %v239 = vld [vmem:[%s236 + $0x10] sm:$0xff]
        %v240 = vld [vmem:[%s236 + $0x18] sm:$0xff]
        %v241 = vld [vmem:[%s1] sm:$0xff]
        %v242 = vld [vmem:[%s1 + $0x8] sm:$0xff]
        %v243 = vld [vmem:[%s1 + $0x10] sm:$0x7]
        %v244 = vld [vmem:[%s2] sm:$0xff]
        %v245 = vld [vmem:[%s2 + $0x8] sm:$0xff]
        %v246 = vld [vmem:[%s2 + $0x10] sm:$0x7]
        %248 = vset.pattern.permute.xlu0 0
        %249 = vperm.xlu0 %248, %v244
        %v250 = vpop.permute.xlu0 %249
        %253 = vset.pattern.permute.xlu0 0
        %254 = vperm.xlu0 %253, %v245
        %v255 = vpop.permute.xlu0 %254
        %258 = vset.pattern.permute.xlu0 0
        %259 = vperm.xlu0 %258, %v246
        %v260 = vpop.permute.xlu0 %259
        %vm262 = vcmask 130048
        %v264 = vsel %vm262, %v241, 0
        %v267 = vsel %vm262, %v242, 0
        %v270 = vsel %vm262, %v243, 0
        %272 = vmatprep.subr.mxu0 %v238
        %273 = vmatpush1.msra.mxu0 %v237
        %274 = vmatprep.subr.mxu0 %v240
        %275 = vmatpush1.msra.mxu0 %v239
        %276 = vmatprep.subr.mxu0 0.0
        %277 = vmatpush1.msra.mxu0 0.0
        %278 = vmatprep.subr.mxu0 0.0
        %279 = vmatpush1.msra.mxu0 0.0
        %280 = vmatprep.subr.mxu0 0.0
        %281 = vmatpush1.msra.mxu0 0.0
        %282 = vmatprep.subr.mxu0 0.0
        %283 = vmatpush1.msra.mxu0 0.0
        %284 = vmatprep.subr.mxu0 0.0
        %285 = vmatpush1.msra.mxu0 0.0
        %286 = vmatprep.subr.mxu0 0.0
        %287 = vmatpush1.msra.mxu0 0.0
        %288 = vmatprep.subr.mxu0 0.0
        %289 = vmatpush1.msra.mxu0 0.0
        %290 = vmatprep.subr.mxu0 0.0
        %291 = vmatpush1.msra.mxu0 0.0
        %292 = vmatprep.subr.mxu0 0.0
        %293 = vmatpush1.msra.mxu0 0.0
        %294 = vmatprep.subr.mxu0 0.0
        %295 = vmatpush1.msra.mxu0 0.0
        %296 = vmatprep.subr.mxu0 0.0
        %297 = vmatpush1.msra.mxu0 0.0
        %298 = vmatprep.subr.mxu0 0.0
        %299 = vmatpush1.msra.mxu0 0.0
        %300 = vmatprep.subr.mxu0 0.0
        %301 = vmatpush1.msra.mxu0 0.0
        %302 = vmatprep.subr.mxu0 0.0
        %303 = vmatpush1.msra.mxu0 0.0
        %304 = vmatprep.subr.mxu0 0.0
        %305 = vmatpush1.msra.mxu0 0.0
        %306 = vmatprep.subr.mxu0 0.0
        %307 = vmatpush1.msra.mxu0 0.0
        %308 = vmatprep.subr.mxu0 0.0
        %309 = vmatpush1.msra.mxu0 0.0
        %310 = vmatprep.subr.mxu0 0.0
        %311 = vmatpush1.msra.mxu0 0.0
        %312 = vmatprep.subr.mxu0 0.0
        %313 = vmatpush1.msra.mxu0 0.0
        %314 = vmatprep.subr.mxu0 0.0
        %315 = vmatpush1.msra.mxu0 0.0
        %316 = vmatprep.subr.mxu0 0.0
        %317 = vmatpush1.msra.mxu0 0.0
        %318 = vmatprep.subr.mxu0 0.0
        %319 = vmatpush1.msra.mxu0 0.0
        %320 = vmatprep.subr.mxu0 0.0
        %321 = vmatpush1.msra.mxu0 0.0
        %322 = vmatprep.subr.mxu0 0.0
        %323 = vmatpush1.msra.mxu0 0.0
        %324 = vmatprep.subr.mxu0 0.0
        %325 = vmatpush1.msra.mxu0 0.0
        %326 = vmatprep.subr.mxu0 0.0
        %327 = vmatpush1.msra.mxu0 0.0
        %328 = vmatprep.subr.mxu0 0.0
        %329 = vmatpush1.msra.mxu0 0.0
        %330 = vmatprep.subr.mxu0 0.0
        %331 = vmatpush1.msra.mxu0 0.0
        %332 = vmatprep.subr.mxu0 0.0
        %333 = vmatpush1.msra.mxu0 0.0
        %334 = vmatprep.subr.mxu0 0.0
        %335 = vmatpush1.msra.mxu0 0.0
        %336 = vmatprep.mubr.f32.mxu0 0.0
        %337 = vmatmul.mubr.f32.gmra.mrb[0].mxu0 %v264
        %v338 = vpop.f32.mrb[0].mxu0
        %v339 = vadd.f32 %v250, %v338
        %v340 = vpop.f32.mrb[0].mxu0
        %v341 = vadd.f32 %v250, %v340
        %342 = vmatprep.mubr.f32.mxu0 0.0
        %343 = vmatmul.mubr.f32.gmra.mrb[0].mxu0 %v267
        %v344 = vpop.f32.mrb[0].mxu0
        %v345 = vadd.f32 %v255, %v344
        %v346 = vpop.f32.mrb[0].mxu0
        %v347 = vadd.f32 %v255, %v346
        %348 = vmatprep.mubr.f32.mxu0 0.0
        %349 = vmatmul.mubr.f32.gmra.mrb[0].mxu0 %v270
        %v350 = vpop.f32.mrb[0].mxu0
        %v351 = vadd.f32 %v260, %v350
        %v352 = vpop.f32.mrb[0].mxu0
        %v353 = vadd.f32 %v260, %v352
        %354 = vdwg.mxu0
        %s355 = smul.u32 %s24, 128
        %s356 = sshra.s32 %s355, 7
        %s357 = sand.u32 %s355, 127
        %s358 = smul.addr %s356, 8
        %s359 = scalar_lea.vmem %s236, %s358
        %v360 = vld [vmem:[%s359] sm:$0xff]
        %v361 = vld [vmem:[%s359 + $0x10] sm:$0xff]
        %v362 = vld [vmem:[%s3] sm:$0x3]
        %v363 = vld [vmem:[%s4] sm:$0x3]
        %365 = vset.pattern.permute.xlu0 0
        %366 = vperm.xlu0 %365, %v363
        %v367 = vpop.permute.xlu0 %366
        %v370 = vsel %vm262, %v362, 0
        %372 = vmatprep.subr.mxu0 0.0
        %373 = vmatpush1.msra.mxu0 %v360
        %374 = vmatprep.subr.mxu0 0.0
        %375 = vmatpush1.msra.mxu0 %v361
        %376 = vmatprep.subr.mxu0 0.0
        %377 = vmatpush1.msra.mxu0 0.0
        %378 = vmatprep.subr.mxu0 0.0
        %379 = vmatpush1.msra.mxu0 0.0
        %380 = vmatprep.subr.mxu0 0.0
        %381 = vmatpush1.msra.mxu0 0.0
        %382 = vmatprep.subr.mxu0 0.0
        %383 = vmatpush1.msra.mxu0 0.0
        %384 = vmatprep.subr.mxu0 0.0
        %385 = vmatpush1.msra.mxu0 0.0
        %386 = vmatprep.subr.mxu0 0.0
        %387 = vmatpush1.msra.mxu0 0.0
        %388 = vmatprep.subr.mxu0 0.0
        %389 = vmatpush1.msra.mxu0 0.0
        %390 = vmatprep.subr.mxu0 0.0
        %391 = vmatpush1.msra.mxu0 0.0
        %392 = vmatprep.subr.mxu0 0.0
        %393 = vmatpush1.msra.mxu0 0.0
        %394 = vmatprep.subr.mxu0 0.0
        %395 = vmatpush1.msra.mxu0 0.0
        %396 = vmatprep.subr.mxu0 0.0
        %397 = vmatpush1.msra.mxu0 0.0
        %398 = vmatprep.subr.mxu0 0.0
        %399 = vmatpush1.msra.mxu0 0.0
        %400 = vmatprep.subr.mxu0 0.0
        %401 = vmatpush1.msra.mxu0 0.0
        %402 = vmatprep.subr.mxu0 0.0
        %403 = vmatpush1.msra.mxu0 0.0
        %404 = vmatprep.subr.mxu0 0.0
        %405 = vmatpush1.msra.mxu0 0.0
        %406 = vmatprep.subr.mxu0 0.0
        %407 = vmatpush1.msra.mxu0 0.0
        %408 = vmatprep.subr.mxu0 0.0
        %409 = vmatpush1.msra.mxu0 0.0
        %410 = vmatprep.subr.mxu0 0.0
        %411 = vmatpush1.msra.mxu0 0.0
        %412 = vmatprep.subr.mxu0 0.0
        %413 = vmatpush1.msra.mxu0 0.0
        %414 = vmatprep.subr.mxu0 0.0
        %415 = vmatpush1.msra.mxu0 0.0
        %416 = vmatprep.subr.mxu0 0.0
        %417 = vmatpush1.msra.mxu0 0.0
        %418 = vmatprep.subr.mxu0 0.0
        %419 = vmatpush1.msra.mxu0 0.0
        %420 = vmatprep.subr.mxu0 0.0
        %421 = vmatpush1.msra.mxu0 0.0
        %422 = vmatprep.subr.mxu0 0.0
        %423 = vmatpush1.msra.mxu0 0.0
        %424 = vmatprep.subr.mxu0 0.0
        %425 = vmatpush1.msra.mxu0 0.0
        %426 = vmatprep.subr.mxu0 0.0
        %427 = vmatpush1.msra.mxu0 0.0
        %428 = vmatprep.subr.mxu0 0.0
        %429 = vmatpush1.msra.mxu0 0.0
        %430 = vmatprep.subr.mxu0 0.0
        %431 = vmatpush1.msra.mxu0 0.0
        %432 = vmatprep.subr.mxu0 0.0
        %433 = vmatpush1.msra.mxu0 0.0
        %434 = vmatprep.subr.mxu0 0.0
        %435 = vmatpush1.msra.mxu0 0.0
        %436 = vmatprep.mubr.f32.mxu0 0.0
        %437 = vmatmul.mubr.f32.gmra.mrb[0].mxu0 %v370
        %v438 = vpop.f32.mrb[0].mxu0
        %v439 = vadd.f32 %v367, %v438
        %v440 = vpop.f32.mrb[0].mxu0
        %441 = vdwg.mxu0
        %442 = vxpose.xlu0.b32.start [1/16] %v439, 128
        %443 = vxpose.xlu0.b32.cont [2/16] 0.0, 128
        %444 = vxpose.xlu0.b32.cont [3/16] 0.0, 128
        %445 = vxpose.xlu0.b32.cont [4/16] 0.0, 128
        %446 = vxpose.xlu0.b32.cont [5/16] 0.0, 128
        %447 = vxpose.xlu0.b32.cont [6/16] 0.0, 128
        %448 = vxpose.xlu0.b32.cont [7/16] 0.0, 128
        %449 = vxpose.xlu0.b32.cont [8/16] 0.0, 128
        %450 = vxpose.xlu0.b32.cont [9/16] 0.0, 128
        %451 = vxpose.xlu0.b32.cont [10/16] 0.0, 128
        %452 = vxpose.xlu0.b32.cont [11/16] 0.0, 128
        %453 = vxpose.xlu0.b32.cont [12/16] 0.0, 128
        %454 = vxpose.xlu0.b32.cont [13/16] 0.0, 128
        %455 = vxpose.xlu0.b32.cont [14/16] 0.0, 128
        %456 = vxpose.xlu0.b32.cont [15/16] 0.0, 128
        %457 = vxpose.xlu0.b32.end [16/16] 0.0, 128
        %v458 = vpop.trf.xlu0
        %v459 = vpop.trf.xlu0
        %v460 = vpop.trf.xlu0
        %v461 = vpop.trf.xlu0
        %v462 = vpop.trf.xlu0
        %v463 = vpop.trf.xlu0
        %v464 = vpop.trf.xlu0
        %v465 = vpop.trf.xlu0
        %v466 = vpop.trf.xlu0
        %v467 = vpop.trf.xlu0
        %v468 = vpop.trf.xlu0
        %v469 = vpop.trf.xlu0
        %v470 = vpop.trf.xlu0
        %v471 = vpop.trf.xlu0
        %v472 = vpop.trf.xlu0
        %v473 = vpop.trf.xlu0
        %v476 = vrot.slane %v351, 1
        %v477 = vrot.slane %v353, 1
        %vm478 = vcmask 15360
        %v480 = vsel %vm478, %v458, 0
        %v483 = vsel %vm478, %v459, 0
        %v486 = vsel %vm478, %v460, 0
        %v489 = vsel %vm478, %v461, 0
        %v492 = vsel %vm478, %v462, 0
        %v495 = vsel %vm478, %v463, 0
        %v498 = vsel %vm478, %v464, 0
        %v501 = vsel %vm478, %v465, 0
        %v504 = vsel %vm478, %v466, 0
        %v507 = vsel %vm478, %v467, 0
        %v510 = vsel %vm478, %v468, 0
        %v513 = vsel %vm478, %v469, 0
        %v516 = vsel %vm478, %v470, 0
        %v519 = vsel %vm478, %v471, 0
        %v522 = vsel %vm478, %v472, 0
        %v525 = vsel %vm478, %v473, 0
        %vm527 = vcmask 1041408
        %v528 = vsel %vm527, %v476, 0
        %v530 = vsel %vm527, %v477, 0
        %532 = vmatprep.subr.mxu0 %v530
        %533 = vmatpush1.msra.mxu0 %v528
        %534 = vmatprep.subr.mxu0 0.0
        %535 = vmatpush1.msra.mxu0 0.0
        %536 = vmatprep.subr.mxu0 0.0
        %537 = vmatpush1.msra.mxu0 0.0
        %538 = vmatprep.subr.mxu0 0.0
        %539 = vmatpush1.msra.mxu0 0.0
        %540 = vmatprep.subr.mxu0 0.0
        %541 = vmatpush1.msra.mxu0 0.0
        %542 = vmatprep.subr.mxu0 0.0
        %543 = vmatpush1.msra.mxu0 0.0
        %544 = vmatprep.subr.mxu0 0.0
        %545 = vmatpush1.msra.mxu0 0.0
        %546 = vmatprep.subr.mxu0 0.0
        %547 = vmatpush1.msra.mxu0 0.0
        %548 = vmatprep.subr.mxu0 0.0
        %549 = vmatpush1.msra.mxu0 0.0
        %550 = vmatprep.subr.mxu0 0.0
        %551 = vmatpush1.msra.mxu0 0.0
        %552 = vmatprep.subr.mxu0 0.0
        %553 = vmatpush1.msra.mxu0 0.0
        %554 = vmatprep.subr.mxu0 0.0
        %555 = vmatpush1.msra.mxu0 0.0
        %556 = vmatprep.subr.mxu0 0.0
        %557 = vmatpush1.msra.mxu0 0.0
        %558 = vmatprep.subr.mxu0 0.0
        %559 = vmatpush1.msra.mxu0 0.0
        %560 = vmatprep.subr.mxu0 0.0
        %561 = vmatpush1.msra.mxu0 0.0
        %562 = vmatprep.subr.mxu0 0.0
        %563 = vmatpush1.msra.mxu0 0.0
        %564 = vmatprep.subr.mxu0 0.0
        %565 = vmatpush1.msra.mxu0 0.0
        %566 = vmatprep.subr.mxu0 0.0
        %567 = vmatpush1.msra.mxu0 0.0
        %568 = vmatprep.subr.mxu0 0.0
        %569 = vmatpush1.msra.mxu0 0.0
        %570 = vmatprep.subr.mxu0 0.0
        %571 = vmatpush1.msra.mxu0 0.0
        %572 = vmatprep.subr.mxu0 0.0
        %573 = vmatpush1.msra.mxu0 0.0
        %574 = vmatprep.subr.mxu0 0.0
        %575 = vmatpush1.msra.mxu0 0.0
        %576 = vmatprep.subr.mxu0 0.0
        %577 = vmatpush1.msra.mxu0 0.0
        %578 = vmatprep.subr.mxu0 0.0
        %579 = vmatpush1.msra.mxu0 0.0
        %580 = vmatprep.subr.mxu0 0.0
        %581 = vmatpush1.msra.mxu0 0.0
        %582 = vmatprep.subr.mxu0 0.0
        %583 = vmatpush1.msra.mxu0 0.0
        %584 = vmatprep.subr.mxu0 0.0
        %585 = vmatpush1.msra.mxu0 0.0
        %586 = vmatprep.subr.mxu0 0.0
        %587 = vmatpush1.msra.mxu0 0.0
        %588 = vmatprep.subr.mxu0 0.0
        %589 = vmatpush1.msra.mxu0 0.0
        %590 = vmatprep.subr.mxu0 0.0
        %591 = vmatpush1.msra.mxu0 0.0
        %592 = vmatprep.subr.mxu0 0.0
        %593 = vmatpush1.msra.mxu0 0.0
        %594 = vmatprep.subr.mxu0 0.0
        %595 = vmatpush1.msra.mxu0 0.0
        %596 = vmatprep.mubr.f32.mxu0 0.0
        %597 = vmatmul.mubr.f32.gmra.mrb[0].mxu0 %v480
        %v598 = vpop.f32.mrb[0].mxu0
        %v599 = vadd.f32 0.0, %v598
        %v600 = vpop.f32.mrb[0].mxu0
        %v601 = vadd.f32 0.0, %v600
        %602 = vmatprep.mubr.f32.mxu0 0.0
        %603 = vmatmul.mubr.f32.gmra.mrb[0].mxu0 %v483
        %v604 = vpop.f32.mrb[0].mxu0
        %v605 = vadd.f32 0.0, %v604
        %v606 = vpop.f32.mrb[0].mxu0
        %v607 = vadd.f32 0.0, %v606
        %608 = vmatprep.mubr.f32.mxu0 0.0
        %609 = vmatmul.mubr.f32.gmra.mrb[0].mxu0 %v486
        %v610 = vpop.f32.mrb[0].mxu0
        %v611 = vadd.f32 0.0, %v610
        %v612 = vpop.f32.mrb[0].mxu0
        %v613 = vadd.f32 0.0, %v612
        %614 = vmatprep.mubr.f32.mxu0 0.0
        %615 = vmatmul.mubr.f32.gmra.mrb[0].mxu0 %v489
        %v616 = vpop.f32.mrb[0].mxu0
        %v617 = vadd.f32 0.0, %v616
        %v618 = vpop.f32.mrb[0].mxu0
        %v619 = vadd.f32 0.0, %v618
        %620 = vmatprep.mubr.f32.mxu0 0.0
        %621 = vmatmul.mubr.f32.gmra.mrb[0].mxu0 %v492
        %v622 = vpop.f32.mrb[0].mxu0
        %v623 = vadd.f32 0.0, %v622
        %v624 = vpop.f32.mrb[0].mxu0
        %v625 = vadd.f32 0.0, %v624
        %626 = vmatprep.mubr.f32.mxu0 0.0
        %627 = vmatmul.mubr.f32.gmra.mrb[0].mxu0 %v495
        %v628 = vpop.f32.mrb[0].mxu0
        %v629 = vadd.f32 0.0, %v628
        %v630 = vpop.f32.mrb[0].mxu0
        %v631 = vadd.f32 0.0, %v630
        %632 = vmatprep.mubr.f32.mxu0 0.0
        %633 = vmatmul.mubr.f32.gmra.mrb[0].mxu0 %v498
        %v634 = vpop.f32.mrb[0].mxu0
        %v635 = vadd.f32 0.0, %v634
        %v636 = vpop.f32.mrb[0].mxu0
        %v637 = vadd.f32 0.0, %v636
        %638 = vmatprep.mubr.f32.mxu0 0.0
        %639 = vmatmul.mubr.f32.gmra.mrb[0].mxu0 %v501
        %v640 = vpop.f32.mrb[0].mxu0
        %v641 = vadd.f32 0.0, %v640
        %v642 = vpop.f32.mrb[0].mxu0
        %v643 = vadd.f32 0.0, %v642
        %644 = vmatprep.mubr.f32.mxu0 0.0
        %645 = vmatmul.mubr.f32.gmra.mrb[0].mxu0 %v504
        %v646 = vpop.f32.mrb[0].mxu0
        %v647 = vadd.f32 0.0, %v646
        %v648 = vpop.f32.mrb[0].mxu0
        %v649 = vadd.f32 0.0, %v648
        %650 = vmatprep.mubr.f32.mxu0 0.0
        %651 = vmatmul.mubr.f32.gmra.mrb[0].mxu0 %v507
        %v652 = vpop.f32.mrb[0].mxu0
        %v653 = vadd.f32 0.0, %v652
        %v654 = vpop.f32.mrb[0].mxu0
        %v655 = vadd.f32 0.0, %v654
        %656 = vmatprep.mubr.f32.mxu0 0.0
        %657 = vmatmul.mubr.f32.gmra.mrb[0].mxu0 %v510
        %v658 = vpop.f32.mrb[0].mxu0
        %v659 = vadd.f32 0.0, %v658
        %v660 = vpop.f32.mrb[0].mxu0
        %v661 = vadd.f32 0.0, %v660
        %662 = vmatprep.mubr.f32.mxu0 0.0
        %663 = vmatmul.mubr.f32.gmra.mrb[0].mxu0 %v513
        %v664 = vpop.f32.mrb[0].mxu0
        %v665 = vadd.f32 0.0, %v664
        %v666 = vpop.f32.mrb[0].mxu0
        %v667 = vadd.f32 0.0, %v666
        %668 = vmatprep.mubr.f32.mxu0 0.0
        %669 = vmatmul.mubr.f32.gmra.mrb[0].mxu0 %v516
        %v670 = vpop.f32.mrb[0].mxu0
        %v671 = vadd.f32 0.0, %v670
        %v672 = vpop.f32.mrb[0].mxu0
        %v673 = vadd.f32 0.0, %v672
        %674 = vmatprep.mubr.f32.mxu0 0.0
        %675 = vmatmul.mubr.f32.gmra.mrb[0].mxu0 %v519
        %v676 = vpop.f32.mrb[0].mxu0
        %v677 = vadd.f32 0.0, %v676
        %v678 = vpop.f32.mrb[0].mxu0
        %v679 = vadd.f32 0.0, %v678
        %680 = vmatprep.mubr.f32.mxu0 0.0
        %681 = vmatmul.mubr.f32.gmra.mrb[0].mxu0 %v522
        %v682 = vpop.f32.mrb[0].mxu0
        %v683 = vadd.f32 0.0, %v682
        %v684 = vpop.f32.mrb[0].mxu0
        %v685 = vadd.f32 0.0, %v684
        %686 = vmatprep.mubr.f32.mxu0 0.0
        %687 = vmatmul.mubr.f32.gmra.mrb[0].mxu0 %v525
        %v688 = vpop.f32.mrb[0].mxu0
        %v689 = vadd.f32 0.0, %v688
        %v690 = vpop.f32.mrb[0].mxu0
        %v691 = vadd.f32 0.0, %v690
        %692 = vdwg.mxu0
        %v693 = vmax.f32 %v599, %v601
        %694 = vmax.xlane.f32.xlu0 %v693
        %v695 = vpop.xlane.xlu0 %694
        %v696 = vmax.f32 %v605, %v607
        %697 = vmax.xlane.f32.xlu0 %v696
        %v698 = vpop.xlane.xlu0 %697
        %v699 = vmax.f32 %v611, %v613
        %700 = vmax.xlane.f32.xlu0 %v699
        %v701 = vpop.xlane.xlu0 %700
        %v702 = vmax.f32 %v617, %v619
        %703 = vmax.xlane.f32.xlu0 %v702
        %v704 = vpop.xlane.xlu0 %703
        %v705 = vmax.f32 %v623, %v625
        %706 = vmax.xlane.f32.xlu0 %v705
        %v707 = vpop.xlane.xlu0 %706
        %v708 = vmax.f32 %v629, %v631
        %709 = vmax.xlane.f32.xlu0 %v708
        %v710 = vpop.xlane.xlu0 %709
        %v711 = vmax.f32 %v635, %v637
        %712 = vmax.xlane.f32.xlu0 %v711
        %v713 = vpop.xlane.xlu0 %712
        %v714 = vmax.f32 %v641, %v643
        %715 = vmax.xlane.f32.xlu0 %v714
        %v716 = vpop.xlane.xlu0 %715
        %v717 = vmax.f32 %v647, %v649
        %718 = vmax.xlane.f32.xlu0 %v717
        %v719 = vpop.xlane.xlu0 %718
        %v720 = vmax.f32 %v653, %v655
        %721 = vmax.xlane.f32.xlu0 %v720
        %v722 = vpop.xlane.xlu0 %721
        %v723 = vmax.f32 %v659, %v661
        %724 = vmax.xlane.f32.xlu0 %v723
        %v725 = vpop.xlane.xlu0 %724
        %v726 = vmax.f32 %v665, %v667
        %727 = vmax.xlane.f32.xlu0 %v726
        %v728 = vpop.xlane.xlu0 %727
        %v729 = vmax.f32 %v671, %v673
        %730 = vmax.xlane.f32.xlu0 %v729
        %v731 = vpop.xlane.xlu0 %730
        %v732 = vmax.f32 %v677, %v679
        %733 = vmax.xlane.f32.xlu0 %v732
        %v734 = vpop.xlane.xlu0 %733
        %v735 = vmax.f32 %v683, %v685
        %736 = vmax.xlane.f32.xlu0 %v735
        %v737 = vpop.xlane.xlu0 %736
        %v738 = vmax.f32 %v689, %v691
        %739 = vmax.xlane.f32.xlu0 %v738
        %v740 = vpop.xlane.xlu0 %739
        %v741 = vsub.f32 %v599, %v695
        %v742 = vsub.f32 %v601, %v695
        %v743 = vsub.f32 %v605, %v698
        %v744 = vsub.f32 %v607, %v698
        %v745 = vsub.f32 %v611, %v701
        %v746 = vsub.f32 %v613, %v701
        %v747 = vsub.f32 %v617, %v704
        %v748 = vsub.f32 %v619, %v704
        %v749 = vsub.f32 %v623, %v707
        %v750 = vsub.f32 %v625, %v707
        %v751 = vsub.f32 %v629, %v710
        %v752 = vsub.f32 %v631, %v710
        %v753 = vsub.f32 %v635, %v713
        %v754 = vsub.f32 %v637, %v713
        %v755 = vsub.f32 %v641, %v716
        %v756 = vsub.f32 %v643, %v716
        %v757 = vsub.f32 %v647, %v719
        %v758 = vsub.f32 %v649, %v719
        %v759 = vsub.f32 %v653, %v722
        %v760 = vsub.f32 %v655, %v722
        %v761 = vsub.f32 %v659, %v725
        %v762 = vsub.f32 %v661, %v725
        %v763 = vsub.f32 %v665, %v728
        %v764 = vsub.f32 %v667, %v728
        %v765 = vsub.f32 %v671, %v731
        %v766 = vsub.f32 %v673, %v731
        %v767 = vsub.f32 %v677, %v734
        %v768 = vsub.f32 %v679, %v734
        %v769 = vsub.f32 %v683, %v737
        %v770 = vsub.f32 %v685, %v737
        %v771 = vsub.f32 %v689, %v740
        %v772 = vsub.f32 %v691, %v740
        %v773 = vmul.f32 %v741, 1.442695
        %v774 = vpow.pop %v773
        %v775 = vmul.f32 %v742, 1.442695
        %v776 = vpow.pop %v775
        %v777 = vmul.f32 %v743, 1.442695
        %v778 = vpow.pop %v777
        %v779 = vmul.f32 %v744, 1.442695
        %v780 = vpow.pop %v779
        %v781 = vmul.f32 %v745, 1.442695
        %v782 = vpow.pop %v781
        %v783 = vmul.f32 %v746, 1.442695
        %v784 = vpow.pop %v783
        %v785 = vmul.f32 %v747, 1.442695
        %v786 = vpow.pop %v785
        %v787 = vmul.f32 %v748, 1.442695
        %v788 = vpow.pop %v787
        %v789 = vmul.f32 %v749, 1.442695
        %v790 = vpow.pop %v789
        %v791 = vmul.f32 %v750, 1.442695
        %v792 = vpow.pop %v791
        %v793 = vmul.f32 %v751, 1.442695
        %v794 = vpow.pop %v793
        %v795 = vmul.f32 %v752, 1.442695
        %v796 = vpow.pop %v795
        %v797 = vmul.f32 %v753, 1.442695
        %v798 = vpow.pop %v797
        %v799 = vmul.f32 %v754, 1.442695
        %v800 = vpow.pop %v799
        %v801 = vmul.f32 %v755, 1.442695
        %v802 = vpow.pop %v801
        %v803 = vmul.f32 %v756, 1.442695
        %v804 = vpow.pop %v803
        %v805 = vmul.f32 %v757, 1.442695
        %v806 = vpow.pop %v805
        %v807 = vmul.f32 %v758, 1.442695
        %v808 = vpow.pop %v807
        %v809 = vmul.f32 %v759, 1.442695
        %v810 = vpow.pop %v809
        %v811 = vmul.f32 %v760, 1.442695
        %v812 = vpow.pop %v811
        %v813 = vmul.f32 %v761, 1.442695
        %v814 = vpow.pop %v813
        %v815 = vmul.f32 %v762, 1.442695
        %v816 = vpow.pop %v815
        %v817 = vmul.f32 %v763, 1.442695
        %v818 = vpow.pop %v817
        %v819 = vmul.f32 %v764, 1.442695
        %v820 = vpow.pop %v819
        %v821 = vmul.f32 %v765, 1.442695
        %v822 = vpow.pop %v821
        %v823 = vmul.f32 %v766, 1.442695
        %v824 = vpow.pop %v823
        %v825 = vmul.f32 %v767, 1.442695
        %v826 = vpow.pop %v825
        %v827 = vmul.f32 %v768, 1.442695
        %v828 = vpow.pop %v827
        %v829 = vmul.f32 %v769, 1.442695
        %v830 = vpow.pop %v829
        %v831 = vmul.f32 %v770, 1.442695
        %v832 = vpow.pop %v831
        %v833 = vmul.f32 %v771, 1.442695
        %v834 = vpow.pop %v833
        %v835 = vmul.f32 %v772, 1.442695
        %v836 = vpow.pop %v835
        %837 = vmatprep.subr.mxu0 %v776
        %838 = vmatpush1.xpose.msra.mxu0 %v774
        %839 = vmatprep.subr.mxu0 %v780
        %840 = vmatpush1.xpose.msra.mxu0 %v778
        %841 = vmatprep.subr.mxu0 %v784
        %842 = vmatpush1.xpose.msra.mxu0 %v782
        %843 = vmatprep.subr.mxu0 %v788
        %844 = vmatpush1.xpose.msra.mxu0 %v786
        %845 = vmatprep.subr.mxu0 %v792
        %846 = vmatpush1.xpose.msra.mxu0 %v790
        %847 = vmatprep.subr.mxu0 %v796
        %848 = vmatpush1.xpose.msra.mxu0 %v794
        %849 = vmatprep.subr.mxu0 %v800
        %850 = vmatpush1.xpose.msra.mxu0 %v798
        %851 = vmatprep.subr.mxu0 %v804
        %852 = vmatpush1.xpose.msra.mxu0 %v802
        %853 = vmatprep.subr.mxu0 %v808
        %854 = vmatpush1.xpose.msra.mxu0 %v806
        %855 = vmatprep.subr.mxu0 %v812
        %856 = vmatpush1.xpose.msra.mxu0 %v810
        %857 = vmatprep.subr.mxu0 %v816
        %858 = vmatpush1.xpose.msra.mxu0 %v814
        %859 = vmatprep.subr.mxu0 %v820
        %860 = vmatpush1.xpose.msra.mxu0 %v818
        %861 = vmatprep.subr.mxu0 %v824
        %862 = vmatpush1.xpose.msra.mxu0 %v822
        %863 = vmatprep.subr.mxu0 %v828
        %864 = vmatpush1.xpose.msra.mxu0 %v826
        %865 = vmatprep.subr.mxu0 %v832
        %866 = vmatpush1.xpose.msra.mxu0 %v830
        %867 = vmatprep.subr.mxu0 %v836
        %868 = vmatpush1.xpose.msra.mxu0 %v834
        %869 = vmatprep.subr.mxu0 0.0
        %870 = vmatpush1.xpose.msra.mxu0 0.0
        %871 = vmatprep.subr.mxu0 0.0
        %872 = vmatpush1.xpose.msra.mxu0 0.0
        %873 = vmatprep.subr.mxu0 0.0
        %874 = vmatpush1.xpose.msra.mxu0 0.0
        %875 = vmatprep.subr.mxu0 0.0
        %876 = vmatpush1.xpose.msra.mxu0 0.0
        %877 = vmatprep.subr.mxu0 0.0
        %878 = vmatpush1.xpose.msra.mxu0 0.0
        %879 = vmatprep.subr.mxu0 0.0
        %880 = vmatpush1.xpose.msra.mxu0 0.0
        %881 = vmatprep.subr.mxu0 0.0
        %882 = vmatpush1.xpose.msra.mxu0 0.0
        %883 = vmatprep.subr.mxu0 0.0
        %884 = vmatpush1.xpose.msra.mxu0 0.0
        %885 = vmatprep.subr.mxu0 0.0
        %886 = vmatpush1.xpose.msra.mxu0 0.0
        %887 = vmatprep.subr.mxu0 0.0
        %888 = vmatpush1.xpose.msra.mxu0 0.0
        %889 = vmatprep.subr.mxu0 0.0
        %890 = vmatpush1.xpose.msra.mxu0 0.0
        %891 = vmatprep.subr.mxu0 0.0
        %892 = vmatpush1.xpose.msra.mxu0 0.0
        %893 = vmatprep.subr.mxu0 0.0
        %894 = vmatpush1.xpose.msra.mxu0 0.0
        %895 = vmatprep.subr.mxu0 0.0
        %896 = vmatpush1.xpose.msra.mxu0 0.0
        %897 = vmatprep.subr.mxu0 0.0
        %898 = vmatpush1.xpose.msra.mxu0 0.0
        %899 = vmatprep.subr.mxu0 0.0
        %900 = vmatpush1.xpose.msra.mxu0 0.0
        %901 = vmatprep.mubr.f32.mxu0 %v341
        %902 = vmatmul.mubr.f32.gmra.mrb[0].mxu0 %v339
        %v903 = vpop.f32.mrb[0].mxu0
        %v904 = vadd.f32 0.0, %v903
        %v905 = vpop.f32.mrb[0].mxu0
        %906 = vmatprep.mubr.f32.mxu0 %v347
        %907 = vmatmul.mubr.f32.gmra.mrb[0].mxu0 %v345
        %v908 = vpop.f32.mrb[0].mxu0
        %v909 = vadd.f32 0.0, %v908
        %v910 = vpop.f32.mrb[0].mxu0
        %911 = vmatprep.mubr.f32.mxu0 %v353
        %912 = vmatmul.mubr.f32.gmra.mrb[0].mxu0 %v351
        %v913 = vpop.f32.mrb[0].mxu0
        %v914 = vadd.f32 0.0, %v913
        %v915 = vpop.f32.mrb[0].mxu0
        %916 = vdwg.mxu0
        %v917 = vrcp.pop %v914
        %v918 = vlaneseq
        %v919 = vshrl.u32 %v918, 7
        %v920 = vsub.s32 0, %v919
        %v921 = vrot.slane %v917, %v920
        %v922 = vmul.f32 %v904, %v921
        %v923 = vmul.f32 %v909, %v921
        %v924 = vfloor.f32 %v922
        %v925 = vfloor.f32 %v923
        %v926 = vmul.f32 %v924, 0.00390625
        %v927 = vmul.f32 %v925, 0.00390625
        %928 = vst [vmem:[%s231] sm:$0xff] %v926
        %929 = vst [vmem:[%s231 + $0x8] sm:$0xff] %v927
        %s930 = sand.u32 %s151, 1
        %s931 = scalar_lea.sflag [#allocation3], %s930
        %s932 = sand.u32 %s151, 1
        %s933 = smul.addr %s932, 16
        %s934 = scalar_lea.vmem [#allocation2], %s933
        // Predicated region
        $region41: #{tpu_custom_call.1} parent=39 // pred_check
          %p935 = pneg %p161
        $region42: #{tpu_custom_call.1} parent=39 // pred_check_branch
          %937 = sbr.rel (%p935) target = $region44
        $region43: #{tpu_custom_call.1} parent=39 // pred_region
          %s939 = ssub.s32 256, 256
          %940 = vsyncadd %s931, %s939
          %s941 = smul.addr %s23, 4
          %s942 = sadd.s32 %s24, %s941
          %s943 = smul.addr %s942, 128
          %s944 = scalar_lea.hbm %s5, %s943
          %s945 = sshll.u32 %s934, 4
          %s946 = int_to_ptr.vmem [resolvable:$true] %s945
          %951 = dma.vmem_to_hbm [thread:$0]  %s946, 256, %s944, %s931, 128, 256, 8
        $region44: #{tpu_custom_call.1} parent=39 // pred_fallthru
          _
      $region40: #{tpu_custom_call.1} parent=5 // pred_fallthru
        _
      %p952 = scmp.le.s32.totalorder 2, %s14
      // Predicated region
      $region45: #{tpu_custom_call.1} parent=5 // pred_check
        %p953 = pneg %p952
      $region46: #{tpu_custom_call.1} parent=5 // pred_check_branch
        %955 = sbr.rel (%p953) target = $region48
      $region47: #{tpu_custom_call.1} parent=5 // pred_region
        %s956 = ssub.s32 %s14, 2
        // Predicated region
        $region49: #{tpu_custom_call.1} parent=47 // pred_check
          %p957 = pneg %p167
        $region50: #{tpu_custom_call.1} parent=47 // pred_check_branch
          %959 = sbr.rel (%p957) target = $region52
        $region51: #{tpu_custom_call.1} parent=47 // pred_region
          %s960 = sand.u32 %s152, 1
          %s961 = scalar_lea.sflag [#allocation3], %s960
          %s962 = sand.u32 %s152, 1
          %s963 = smul.addr %s962, 16
          %s964 = scalar_lea.vmem [#allocation2], %s963
          %965 = dma.done %s961, 256
        $region52: #{tpu_custom_call.1} parent=47 // pred_fallthru
          _
      $region48: #{tpu_custom_call.1} parent=5 // pred_fallthru
        _
    $region6: #{tpu_custom_call.1} parent=1 // loop_footer
      %s18 = sadd.s32 1, %s14
    $region7: #{tpu_custom_call.1} parent=1 // loop_footer_branch
      %13 = sbr.rel target = $region3
    $region8: #{tpu_custom_call.1} parent=1 // loop_exit
      _
    %966 = vsyncpa [#allocation3], 1
    %s967 = scalar_lea.sflag [#allocation3], 1
    %968 = vsyncpa %s967, 1

</llo_original>
